<compile_context>
chip_gen: v6e
topology: v6e:2x2x1
jax: 0.10.0
libtpu: 0.0.40
codegen_flags: <defaults>
</compile_context>

<pallas_src>
import functools

import jax
import jax.numpy as jnp
from jax import lax
from jax.experimental import pallas as pl
from jax.experimental.pallas import tpu as pltpu

LN_EPS = 1e-5  # PyTorch nn.LayerNorm default eps


def _round_up(x: int, m: int) -> int:
    return ((x + m - 1) // m) * m


def _vmem_capacity_bytes() -> int:
    """Per-TensorCore VMEM capacity; generation-aware with safe fallbacks."""
    try:
        info_fn = getattr(pltpu, "get_tpu_info", None)
        if info_fn is not None:
            cap = getattr(info_fn(), "vmem_capacity_bytes", None)
            if cap:
                return int(cap)
    except Exception:
        pass
    try:
        kind = jax.devices()[0].device_kind.lower()
    except Exception:
        kind = ""
    if "v7" in kind:
        return 64 * 1024 * 1024
    if "v5" in kind or "v6" in kind:
        return 128 * 1024 * 1024
    return 64 * 1024 * 1024  # unknown chip: assume the small (v7x-class) VMEM


def _select_config(batch, d_model, n_cls, x_itemsize, tb_user):
    """Pick (tb, batch_p, d_pad, n_pad, vmem_limit) for the current TPU generation."""
    d_pad = _round_up(d_model, 128)
    n_pad = _round_up(n_cls, 128)

    vmem_cap = _vmem_capacity_bytes()
    is_v7_class = vmem_cap < (96 << 20)   # 64 MiB/TC => 2 TensorCores per chip
    budget = int(vmem_cap * 0.82)         # ~53 MiB on v7x, ~105 MiB on v5e/v6e

    # tb-independent residents: single-buffered bf16 weights + f32 bias/LN rows
    # ((1, d) rows sublane-pad to 8 rows in VMEM).
    weight_bytes = (2 * d_pad * d_pad + d_pad * n_pad) * 2
    vec_bytes = (4 * d_pad + n_pad) * 4 * 8

    def tile_bytes(tb):
        x_b = 2 * tb * d_pad * x_itemsize   # double-buffered x tile
        o_b = 2 * tb * n_pad * 4            # double-buffered f32 out tile
        h_b = 2 * tb * d_pad * 4            # f32 intermediates inside the body
        return x_b + o_b + h_b

    if tb_user is not None:
        tb = tb_user
    elif batch < 128:
        # Tiny batches: one small sublane-aligned tile; padding to 256 would just
        # waste MXU work.
        tb = _round_up(max(batch, 8), 8)
    else:
        # MXU-aligned (256 is also a multiple of v5e's 128) and VMEM-budgeted.
        cap = 1024 if is_v7_class else 2048
        tb = min(_round_up(batch, 256), cap)
        while tb > 256 and weight_bytes + vec_bytes + tile_bytes(tb) > budget:
            tb -= 256
        # v7x: make sure the "parallel" batch axis has >= 2 steps so both
        # TensorCores get work.
        if is_v7_class and batch >= 512 and _round_up(batch, tb) == tb:
            tb = max(256, _round_up(tb // 2, 256))

    batch_p = _round_up(batch, tb)
    need = weight_bytes + vec_bytes + tile_bytes(tb)
    vmem_limit = max(budget, min(need + (4 << 20), int(vmem_cap * 0.9)))
    return (int(tb), int(batch_p), int(d_pad), int(n_pad), int(vmem_limit))


def _layernorm(h, gamma, beta, d_real):
    """Two-pass LayerNorm over the REAL feature width (padded lanes masked)."""
    d_pad = h.shape[-1]
    inv_d = 1.0 / float(d_real)
    # Padded h columns are exactly zero (zero-padded weights/bias), so the sum
    # over d_pad equals the sum over d_real.
    mu = jnp.sum(h, axis=-1, keepdims=True) * inv_d
    if d_pad == d_real:
        c = h - mu
    else:
        mask = lax.broadcasted_iota(jnp.int32, h.shape, dimension=1) < d_real
        c = jnp.where(mask, h - mu, 0.0)
    var = jnp.sum(c * c, axis=-1, keepdims=True) * inv_d
    # Padded gamma/beta are zero, so padded output lanes stay exactly zero.
    return c * lax.rsqrt(var + LN_EPS) * gamma + beta


def _ara_cls_decoder_kernel(
    x_ref,
    w1_ref, b1_ref, g1_ref, be1_ref,
    w2_ref, b2_ref, g2_ref, be2_ref,
    wo_ref, bo_ref,
    out_ref,
    *, d_real,
):
    # Block 1: Linear -> ReLU -> LayerNorm  (bf16 matmul, f32 accumulate/elementwise)
    x = x_ref[...].astype(jnp.bfloat16)
    h = jnp.dot(x, w1_ref[...], preferred_element_type=jnp.float32) + b1_ref[...]
    h = jnp.maximum(h, 0.0)
    h = _layernorm(h, g1_ref[...], be1_ref[...], d_real)

    # Block 2: Linear -> ReLU -> LayerNorm
    h = jnp.dot(h.astype(jnp.bfloat16), w2_ref[...],
                preferred_element_type=jnp.float32) + b2_ref[...]
    h = jnp.maximum(h, 0.0)
    h = _layernorm(h, g2_ref[...], be2_ref[...], d_real)

    # Output layer: Linear(d_model, n_pad) -- lane-dense store; pad cols sliced outside.
    out = jnp.dot(h.astype(jnp.bfloat16), wo_ref[...],
                  preferred_element_type=jnp.float32) + bo_ref[...]
    out_ref[...] = out.astype(out_ref.dtype)


@functools.partial(jax.jit, static_argnames=("cfg", "weight_bufs"))
def _forward(x, params, *, cfg, weight_bufs):
    tb, batch_p, d_pad, n_pad, vmem_limit = cfg
    batch, d_model = x.shape
    n_cls = params["wo"].shape[1]

    # Zero-pad everything to lane/sublane-dense shapes.  Padding never changes the
    # real outputs: padded weight rows/cols are zero and LayerNorm masks them.
    if batch_p != batch or d_pad != d_model:
        x = jnp.pad(x, ((0, batch_p - batch), (0, d_pad - d_model)))

    def pad_mat(w, cols):
        return jnp.pad(w, ((0, d_pad - w.shape[0]), (0, cols - w.shape[1])))

    def pad_row(v, cols):
        return jnp.pad(v, ((0, 0), (0, cols - v.shape[1])))

    w1 = pad_mat(params["w1"], d_pad).astype(jnp.bfloat16)
    w2 = pad_mat(params["w2"], d_pad).astype(jnp.bfloat16)
    wo = pad_mat(params["wo"], n_pad).astype(jnp.bfloat16)
    b1 = pad_row(params["b1"], d_pad)
    g1 = pad_row(params["g1"], d_pad)
    be1 = pad_row(params["be1"], d_pad)
    b2 = pad_row(params["b2"], d_pad)
    g2 = pad_row(params["g2"], d_pad)
    be2 = pad_row(params["be2"], d_pad)
    bo = pad_row(params["bo"], n_pad)

    def row_map(i):
        return (i, 0)

    def const_map(i):
        return (0, 0)

    if weight_bufs == 1:
        def const_spec(shape):
            # Constant index_map => the block never changes; single-buffer it so
            # resident weights use half the VMEM of the default pipelining.
            return pl.BlockSpec(shape, const_map, pipeline_mode=pl.Buffered(1))
    else:
        def const_spec(shape):
            return pl.BlockSpec(shape, const_map)

    in_specs = [
        pl.BlockSpec((tb, d_pad), row_map),   # x (streamed with the grid)
        const_spec((d_pad, d_pad)),           # w1
        const_spec((1, d_pad)),               # b1
        const_spec((1, d_pad)),               # g1
        const_spec((1, d_pad)),               # be1
        const_spec((d_pad, d_pad)),           # w2
        const_spec((1, d_pad)),               # b2
        const_spec((1, d_pad)),               # g2
        const_spec((1, d_pad)),               # be2
        const_spec((d_pad, n_pad)),           # wo (padded)
        const_spec((1, n_pad)),               # bo (padded)
    ]
    out_spec = pl.BlockSpec((tb, n_pad), row_map)

    kernel = functools.partial(_ara_cls_decoder_kernel, d_real=d_model)

    out = pl.pallas_call(
        kernel,
        out_shape=jax.ShapeDtypeStruct((batch_p, n_pad), jnp.float32),
        grid=(batch_p // tb,),
        in_specs=in_specs,
        out_specs=out_spec,
        compiler_params=pltpu.CompilerParams(
            dimension_semantics=("parallel",),   # shard batch tiles across TCs (v7x)
            vmem_limit_bytes=vmem_limit,         # generation-aware scoped VMEM
        ),
    )(x, w1, b1, g1, be1, w2, b2, g2, be2, wo, bo)

    return out[:batch, :n_cls]


_SINGLE_BUFFER_WEIGHTS_OK = None  # cached: does this JAX accept pl.Buffered(1)?


def ara_cls_decoder(x, params, *, tb=None):
    """x: [batch, d_model] float (f32 or bf16). params: dict (see init_params)."""
    global _SINGLE_BUFFER_WEIGHTS_OK
    batch, d_model = x.shape
    n_cls = params["wo"].shape[1]
    cfg = _select_config(batch, d_model, n_cls, x.dtype.itemsize, tb)

    if _SINGLE_BUFFER_WEIGHTS_OK is not False:
        try:
            out = _forward(x, params, cfg=cfg, weight_bufs=1)
            _SINGLE_BUFFER_WEIGHTS_OK = True
            return out
        except Exception:
            if _SINGLE_BUFFER_WEIGHTS_OK is True:
                raise
            _SINGLE_BUFFER_WEIGHTS_OK = False
    # Fallback: default double-buffered weight specs (same results, more VMEM).
    return _forward(x, params, cfg=cfg, weight_bufs=2)


def init_params(key, d_model, n_cls):
    """Deterministic synthetic parameters matching the module's shapes ([in, out])."""
    ks = jax.random.split(key, 6)
    scale = 1.0 / jnp.sqrt(jnp.float32(d_model))
    return {
        "w1": jax.random.normal(ks[0], (d_model, d_model), jnp.float32) * scale,
        "b1": jax.random.normal(ks[1], (1, d_model), jnp.float32) * 0.01,
        "g1": jnp.ones((1, d_model), jnp.float32),    # LayerNorm weight
        "be1": jnp.zeros((1, d_model), jnp.float32),  # LayerNorm bias
        "w2": jax.random.normal(ks[2], (d_model, d_model), jnp.float32) * scale,
        "b2": jax.random.normal(ks[3], (1, d_model), jnp.float32) * 0.01,
        "g2": jnp.ones((1, d_model), jnp.float32),
        "be2": jnp.zeros((1, d_model), jnp.float32),
        "wo": jax.random.normal(ks[4], (d_model, n_cls), jnp.float32) * scale,
        "bo": jax.random.normal(ks[5], (1, n_cls), jnp.float32) * 0.01,
    }


def _reference(x, p):
    """Pure-JAX reference (same bf16-matmul / f32-accumulate numerics as the kernel)."""
    def ln(h, g, b):
        mu = jnp.mean(h, axis=-1, keepdims=True)
        var = jnp.mean((h - mu) ** 2, axis=-1, keepdims=True)
        return (h - mu) / jnp.sqrt(var + LN_EPS) * g + b

    def mm(a, w):
        return jnp.dot(a.astype(jnp.bfloat16), w.astype(jnp.bfloat16),
                       preferred_element_type=jnp.float32)

    h = jnp.maximum(mm(x, p["w1"]) + p["b1"], 0.0)
    h = ln(h, p["g1"], p["be1"])
    h = jnp.maximum(mm(h, p["w2"]) + p["b2"], 0.0)
    h = ln(h, p["g2"], p["be2"])
    return mm(h, p["wo"]) + p["bo"]


if __name__ == "__main__":
    key = jax.random.PRNGKey(0)
    k_x, k_p = jax.random.split(key)

    batch, d_model, n_cls = 2, 32, 8
    x = jax.random.normal(k_x, (batch, d_model), jnp.float32)
    params = init_params(k_p, d_model, n_cls)

    out = ara_cls_decoder(x, params)
    out = jax.block_until_ready(out)

    ref = _reference(x, params)
    assert out.shape == (batch, n_cls), f"bad shape {out.shape}"
    assert jnp.allclose(out, ref, atol=1e-2, rtol=1e-2), "mismatch vs reference"

    print("KERNEL_OK")
</pallas_src>

<mosaic_0001>
module attributes {stable_mosaic.version = 11 : i64} {
  func.func @_ara_cls_decoder_kernel(%arg0: i32, %arg1: memref<8x128xf32, #tpu.memory_space<vmem>>, %arg2: memref<128x128xbf16, #tpu.memory_space<vmem>>, %arg3: memref<1x128xf32, #tpu.memory_space<vmem>>, %arg4: memref<1x128xf32, #tpu.memory_space<vmem>>, %arg5: memref<1x128xf32, #tpu.memory_space<vmem>>, %arg6: memref<128x128xbf16, #tpu.memory_space<vmem>>, %arg7: memref<1x128xf32, #tpu.memory_space<vmem>>, %arg8: memref<1x128xf32, #tpu.memory_space<vmem>>, %arg9: memref<1x128xf32, #tpu.memory_space<vmem>>, %arg10: memref<128x128xbf16, #tpu.memory_space<vmem>>, %arg11: memref<1x128xf32, #tpu.memory_space<vmem>>, %arg12: memref<8x128xf32, #tpu.memory_space<vmem>>) attributes {dimension_semantics = [#tpu.dimension_semantics<parallel>], iteration_bounds = array<i64: 1>, scalar_prefetch = 0 : i64, scratch_operands = 0 : i64, tpu.core_type = #tpu.core_type<tc>, window_params = [{transform_indices = @transform_0, window_bounds = array<i64: 8, 128>}, {pipeline_mode = #tpu.pipeline_mode<synchronous>, transform_indices = @transform_1, window_bounds = array<i64: 128, 128>}, {pipeline_mode = #tpu.pipeline_mode<synchronous>, transform_indices = @transform_2, window_bounds = array<i64: 1, 128>}, {pipeline_mode = #tpu.pipeline_mode<synchronous>, transform_indices = @transform_3, window_bounds = array<i64: 1, 128>}, {pipeline_mode = #tpu.pipeline_mode<synchronous>, transform_indices = @transform_4, window_bounds = array<i64: 1, 128>}, {pipeline_mode = #tpu.pipeline_mode<synchronous>, transform_indices = @transform_5, window_bounds = array<i64: 128, 128>}, {pipeline_mode = #tpu.pipeline_mode<synchronous>, transform_indices = @transform_6, window_bounds = array<i64: 1, 128>}, {pipeline_mode = #tpu.pipeline_mode<synchronous>, transform_indices = @transform_7, window_bounds = array<i64: 1, 128>}, {pipeline_mode = #tpu.pipeline_mode<synchronous>, transform_indices = @transform_8, window_bounds = array<i64: 1, 128>}, {pipeline_mode = #tpu.pipeline_mode<synchronous>, transform_indices = @transform_9, window_bounds = array<i64: 128, 128>}, {pipeline_mode = #tpu.pipeline_mode<synchronous>, transform_indices = @transform_10, window_bounds = array<i64: 1, 128>}, {transform_indices = @transform_11, window_bounds = array<i64: 8, 128>}]} {
    %c0 = arith.constant 0 : index
    %c0_0 = arith.constant 0 : index
    %0 = vector.load %arg1[%c0, %c0_0] : memref<8x128xf32, #tpu.memory_space<vmem>>, vector<8x128xf32>
    %1 = arith.truncf %0 : vector<8x128xf32> to vector<8x128xbf16>
    %c0_1 = arith.constant 0 : index
    %c0_2 = arith.constant 0 : index
    %2 = vector.load %arg2[%c0_1, %c0_2] : memref<128x128xbf16, #tpu.memory_space<vmem>>, vector<128x128xbf16>
    %cst = arith.constant dense<0.000000e+00> : vector<8x128xf32>
    %3 = tpu.matmul %1, %2, %cst {dimension_numbers = #tpu.dot_dimension_numbers<[1], [0], [0], [1], [0, 0, 1, 1], [], []>} : vector<8x128xbf16>, vector<128x128xbf16>, vector<8x128xf32> -> vector<8x128xf32>
    %c0_3 = arith.constant 0 : index
    %c0_4 = arith.constant 0 : index
    %4 = vector.load %arg3[%c0_3, %c0_4] : memref<1x128xf32, #tpu.memory_space<vmem>>, vector<1x128xf32>
    %5 = vector.broadcast %4 : vector<1x128xf32> to vector<8x128xf32>
    %6 = arith.addf %3, %5 : vector<8x128xf32>
    %cst_5 = arith.constant 0.000000e+00 : f32
    %7 = vector.broadcast %cst_5 : f32 to vector<8x128xf32>
    %8 = arith.maximumf %6, %7 : vector<8x128xf32>
    %c0_6 = arith.constant 0 : index
    %c0_7 = arith.constant 0 : index
    %9 = vector.load %arg4[%c0_6, %c0_7] : memref<1x128xf32, #tpu.memory_space<vmem>>, vector<1x128xf32>
    %c0_8 = arith.constant 0 : index
    %c0_9 = arith.constant 0 : index
    %10 = vector.load %arg5[%c0_8, %c0_9] : memref<1x128xf32, #tpu.memory_space<vmem>>, vector<1x128xf32>
    %cst_10 = arith.constant dense<0.000000e+00> : vector<8xf32>
    %11 = vector.multi_reduction <add>, %8, %cst_10 [1] : vector<8x128xf32> to vector<8xf32>
    %12 = vector.shape_cast %11 : vector<8xf32> to vector<8x1xf32>
    %cst_11 = arith.constant 3.125000e-02 : f32
    %13 = vector.broadcast %cst_11 : f32 to vector<8x1xf32>
    %14 = arith.mulf %12, %13 : vector<8x1xf32>
    %15 = tpu.iota {dimensions = array<i32: 1>} : vector<8x128xi32>
    %c32_i32 = arith.constant 32 : i32
    %16 = vector.broadcast %c32_i32 : i32 to vector<8x128xi32>
    %17 = arith.cmpi slt, %15, %16 : vector<8x128xi32>
    %18 = vector.broadcast %14 : vector<8x1xf32> to vector<8x128xf32>
    %19 = arith.subf %8, %18 : vector<8x128xf32>
    %cst_12 = arith.constant 0.000000e+00 : f32
    %20 = vector.broadcast %cst_12 : f32 to vector<8x128xf32>
    %21 = arith.select %17, %19, %20 : vector<8x128xi1>, vector<8x128xf32>
    %22 = arith.mulf %21, %21 : vector<8x128xf32>
    %cst_13 = arith.constant dense<0.000000e+00> : vector<8xf32>
    %23 = vector.multi_reduction <add>, %22, %cst_13 [1] : vector<8x128xf32> to vector<8xf32>
    %24 = vector.shape_cast %23 : vector<8xf32> to vector<8x1xf32>
    %cst_14 = arith.constant 3.125000e-02 : f32
    %25 = vector.broadcast %cst_14 : f32 to vector<8x1xf32>
    %26 = arith.mulf %24, %25 : vector<8x1xf32>
    %cst_15 = arith.constant 9.99999974E-6 : f32
    %27 = vector.broadcast %cst_15 : f32 to vector<8x1xf32>
    %28 = arith.addf %26, %27 : vector<8x1xf32>
    %29 = math.rsqrt %28 : vector<8x1xf32>
    %30 = vector.broadcast %29 : vector<8x1xf32> to vector<8x128xf32>
    %31 = arith.mulf %21, %30 : vector<8x128xf32>
    %32 = vector.broadcast %9 : vector<1x128xf32> to vector<8x128xf32>
    %33 = arith.mulf %31, %32 : vector<8x128xf32>
    %34 = vector.broadcast %10 : vector<1x128xf32> to vector<8x128xf32>
    %35 = arith.addf %33, %34 : vector<8x128xf32>
    %36 = arith.truncf %35 : vector<8x128xf32> to vector<8x128xbf16>
    %c0_16 = arith.constant 0 : index
    %c0_17 = arith.constant 0 : index
    %37 = vector.load %arg6[%c0_16, %c0_17] : memref<128x128xbf16, #tpu.memory_space<vmem>>, vector<128x128xbf16>
    %cst_18 = arith.constant dense<0.000000e+00> : vector<8x128xf32>
    %38 = tpu.matmul %36, %37, %cst_18 {dimension_numbers = #tpu.dot_dimension_numbers<[1], [0], [0], [1], [0, 0, 1, 1], [], []>} : vector<8x128xbf16>, vector<128x128xbf16>, vector<8x128xf32> -> vector<8x128xf32>
    %c0_19 = arith.constant 0 : index
    %c0_20 = arith.constant 0 : index
    %39 = vector.load %arg7[%c0_19, %c0_20] : memref<1x128xf32, #tpu.memory_space<vmem>>, vector<1x128xf32>
    %40 = vector.broadcast %39 : vector<1x128xf32> to vector<8x128xf32>
    %41 = arith.addf %38, %40 : vector<8x128xf32>
    %cst_21 = arith.constant 0.000000e+00 : f32
    %42 = vector.broadcast %cst_21 : f32 to vector<8x128xf32>
    %43 = arith.maximumf %41, %42 : vector<8x128xf32>
    %c0_22 = arith.constant 0 : index
    %c0_23 = arith.constant 0 : index
    %44 = vector.load %arg8[%c0_22, %c0_23] : memref<1x128xf32, #tpu.memory_space<vmem>>, vector<1x128xf32>
    %c0_24 = arith.constant 0 : index
    %c0_25 = arith.constant 0 : index
    %45 = vector.load %arg9[%c0_24, %c0_25] : memref<1x128xf32, #tpu.memory_space<vmem>>, vector<1x128xf32>
    %cst_26 = arith.constant dense<0.000000e+00> : vector<8xf32>
    %46 = vector.multi_reduction <add>, %43, %cst_26 [1] : vector<8x128xf32> to vector<8xf32>
    %47 = vector.shape_cast %46 : vector<8xf32> to vector<8x1xf32>
    %cst_27 = arith.constant 3.125000e-02 : f32
    %48 = vector.broadcast %cst_27 : f32 to vector<8x1xf32>
    %49 = arith.mulf %47, %48 : vector<8x1xf32>
    %50 = tpu.iota {dimensions = array<i32: 1>} : vector<8x128xi32>
    %c32_i32_28 = arith.constant 32 : i32
    %51 = vector.broadcast %c32_i32_28 : i32 to vector<8x128xi32>
    %52 = arith.cmpi slt, %50, %51 : vector<8x128xi32>
    %53 = vector.broadcast %49 : vector<8x1xf32> to vector<8x128xf32>
    %54 = arith.subf %43, %53 : vector<8x128xf32>
    %cst_29 = arith.constant 0.000000e+00 : f32
    %55 = vector.broadcast %cst_29 : f32 to vector<8x128xf32>
    %56 = arith.select %52, %54, %55 : vector<8x128xi1>, vector<8x128xf32>
    %57 = arith.mulf %56, %56 : vector<8x128xf32>
    %cst_30 = arith.constant dense<0.000000e+00> : vector<8xf32>
    %58 = vector.multi_reduction <add>, %57, %cst_30 [1] : vector<8x128xf32> to vector<8xf32>
    %59 = vector.shape_cast %58 : vector<8xf32> to vector<8x1xf32>
    %cst_31 = arith.constant 3.125000e-02 : f32
    %60 = vector.broadcast %cst_31 : f32 to vector<8x1xf32>
    %61 = arith.mulf %59, %60 : vector<8x1xf32>
    %cst_32 = arith.constant 9.99999974E-6 : f32
    %62 = vector.broadcast %cst_32 : f32 to vector<8x1xf32>
    %63 = arith.addf %61, %62 : vector<8x1xf32>
    %64 = math.rsqrt %63 : vector<8x1xf32>
    %65 = vector.broadcast %64 : vector<8x1xf32> to vector<8x128xf32>
    %66 = arith.mulf %56, %65 : vector<8x128xf32>
    %67 = vector.broadcast %44 : vector<1x128xf32> to vector<8x128xf32>
    %68 = arith.mulf %66, %67 : vector<8x128xf32>
    %69 = vector.broadcast %45 : vector<1x128xf32> to vector<8x128xf32>
    %70 = arith.addf %68, %69 : vector<8x128xf32>
    %71 = arith.truncf %70 : vector<8x128xf32> to vector<8x128xbf16>
    %c0_33 = arith.constant 0 : index
    %c0_34 = arith.constant 0 : index
    %72 = vector.load %arg10[%c0_33, %c0_34] : memref<128x128xbf16, #tpu.memory_space<vmem>>, vector<128x128xbf16>
    %cst_35 = arith.constant dense<0.000000e+00> : vector<8x128xf32>
    %73 = tpu.matmul %71, %72, %cst_35 {dimension_numbers = #tpu.dot_dimension_numbers<[1], [0], [0], [1], [0, 0, 1, 1], [], []>} : vector<8x128xbf16>, vector<128x128xbf16>, vector<8x128xf32> -> vector<8x128xf32>
    %c0_36 = arith.constant 0 : index
    %c0_37 = arith.constant 0 : index
    %74 = vector.load %arg11[%c0_36, %c0_37] : memref<1x128xf32, #tpu.memory_space<vmem>>, vector<1x128xf32>
    %75 = vector.broadcast %74 : vector<1x128xf32> to vector<8x128xf32>
    %76 = arith.addf %73, %75 : vector<8x128xf32>
    %c0_38 = arith.constant 0 : index
    %c0_39 = arith.constant 0 : index
    %77 = vector.load %arg12[%c0_38, %c0_39] : memref<8x128xf32, #tpu.memory_space<vmem>>, vector<8x128xf32>
    tpu.vector_store %arg12[%c0_38, %c0_39], %76 {strides = array<i32>} : memref<8x128xf32, #tpu.memory_space<vmem>>, vector<8x128xf32>,
    return
  }
  func.func @transform_0(%arg0: i32) -> (i32, i32) {
    %c0_i32 = arith.constant 0 : i32
    %c0_i32_0 = arith.constant 0 : i32
    return %arg0, %c0_i32 : i32, i32
  }
  func.func @transform_1(%arg0: i32) -> (i32, i32) {
    %c0_i32 = arith.constant 0 : i32
    %c0_i32_0 = arith.constant 0 : i32
    %c0_i32_1 = arith.constant 0 : i32
    return %c0_i32, %c0_i32_0 : i32, i32
  }
  func.func @transform_2(%arg0: i32) -> (i32, i32) {
    %c0_i32 = arith.constant 0 : i32
    %c0_i32_0 = arith.constant 0 : i32
    %c0_i32_1 = arith.constant 0 : i32
    return %c0_i32, %c0_i32_0 : i32, i32
  }
  func.func @transform_3(%arg0: i32) -> (i32, i32) {
    %c0_i32 = arith.constant 0 : i32
    %c0_i32_0 = arith.constant 0 : i32
    %c0_i32_1 = arith.constant 0 : i32
    return %c0_i32, %c0_i32_0 : i32, i32
  }
  func.func @transform_4(%arg0: i32) -> (i32, i32) {
    %c0_i32 = arith.constant 0 : i32
    %c0_i32_0 = arith.constant 0 : i32
    %c0_i32_1 = arith.constant 0 : i32
    return %c0_i32, %c0_i32_0 : i32, i32
  }
  func.func @transform_5(%arg0: i32) -> (i32, i32) {
    %c0_i32 = arith.constant 0 : i32
    %c0_i32_0 = arith.constant 0 : i32
    %c0_i32_1 = arith.constant 0 : i32
    return %c0_i32, %c0_i32_0 : i32, i32
  }
  func.func @transform_6(%arg0: i32) -> (i32, i32) {
    %c0_i32 = arith.constant 0 : i32
    %c0_i32_0 = arith.constant 0 : i32
    %c0_i32_1 = arith.constant 0 : i32
    return %c0_i32, %c0_i32_0 : i32, i32
  }
  func.func @transform_7(%arg0: i32) -> (i32, i32) {
    %c0_i32 = arith.constant 0 : i32
    %c0_i32_0 = arith.constant 0 : i32
    %c0_i32_1 = arith.constant 0 : i32
    return %c0_i32, %c0_i32_0 : i32, i32
  }
  func.func @transform_8(%arg0: i32) -> (i32, i32) {
    %c0_i32 = arith.constant 0 : i32
    %c0_i32_0 = arith.constant 0 : i32
    %c0_i32_1 = arith.constant 0 : i32
    return %c0_i32, %c0_i32_0 : i32, i32
  }
  func.func @transform_9(%arg0: i32) -> (i32, i32) {
    %c0_i32 = arith.constant 0 : i32
    %c0_i32_0 = arith.constant 0 : i32
    %c0_i32_1 = arith.constant 0 : i32
    return %c0_i32, %c0_i32_0 : i32, i32
  }
  func.func @transform_10(%arg0: i32) -> (i32, i32) {
    %c0_i32 = arith.constant 0 : i32
    %c0_i32_0 = arith.constant 0 : i32
    %c0_i32_1 = arith.constant 0 : i32
    return %c0_i32, %c0_i32_0 : i32, i32
  }
  func.func @transform_11(%arg0: i32) -> (i32, i32) {
    %c0_i32 = arith.constant 0 : i32
    %c0_i32_0 = arith.constant 0 : i32
    return %arg0, %c0_i32 : i32, i32
  }
}

module attributes {stable_mosaic.version = 11 : i64} {
  func.func @_ara_cls_decoder_kernel(%arg0: i32, %arg1: memref<8x128xf32, #tpu.memory_space<vmem>>, %arg2: memref<128x128xbf16, #tpu.memory_space<vmem>>, %arg3: memref<1x128xf32, #tpu.memory_space<vmem>>, %arg4: memref<1x128xf32, #tpu.memory_space<vmem>>, %arg5: memref<1x128xf32, #tpu.memory_space<vmem>>, %arg6: memref<128x128xbf16, #tpu.memory_space<vmem>>, %arg7: memref<1x128xf32, #tpu.memory_space<vmem>>, %arg8: memref<1x128xf32, #tpu.memory_space<vmem>>, %arg9: memref<1x128xf32, #tpu.memory_space<vmem>>, %arg10: memref<128x128xbf16, #tpu.memory_space<vmem>>, %arg11: memref<1x128xf32, #tpu.memory_space<vmem>>, %arg12: memref<8x128xf32, #tpu.memory_space<vmem>>) attributes {dimension_semantics = [#tpu.dimension_semantics<parallel>], iteration_bounds = array<i64: 1>, scalar_prefetch = 0 : i64, scratch_operands = 0 : i64, tpu.core_type = #tpu.core_type<tc>, window_params = [{transform_indices = @transform_0, window_bounds = array<i64: 8, 128>}, {pipeline_mode = #tpu.pipeline_mode<synchronous>, transform_indices = @transform_1, window_bounds = array<i64: 128, 128>}, {pipeline_mode = #tpu.pipeline_mode<synchronous>, transform_indices = @transform_2, window_bounds = array<i64: 1, 128>}, {pipeline_mode = #tpu.pipeline_mode<synchronous>, transform_indices = @transform_3, window_bounds = array<i64: 1, 128>}, {pipeline_mode = #tpu.pipeline_mode<synchronous>, transform_indices = @transform_4, window_bounds = array<i64: 1, 128>}, {pipeline_mode = #tpu.pipeline_mode<synchronous>, transform_indices = @transform_5, window_bounds = array<i64: 128, 128>}, {pipeline_mode = #tpu.pipeline_mode<synchronous>, transform_indices = @transform_6, window_bounds = array<i64: 1, 128>}, {pipeline_mode = #tpu.pipeline_mode<synchronous>, transform_indices = @transform_7, window_bounds = array<i64: 1, 128>}, {pipeline_mode = #tpu.pipeline_mode<synchronous>, transform_indices = @transform_8, window_bounds = array<i64: 1, 128>}, {pipeline_mode = #tpu.pipeline_mode<synchronous>, transform_indices = @transform_9, window_bounds = array<i64: 128, 128>}, {pipeline_mode = #tpu.pipeline_mode<synchronous>, transform_indices = @transform_10, window_bounds = array<i64: 1, 128>}, {transform_indices = @transform_11, window_bounds = array<i64: 8, 128>}]} {
    %c0 = arith.constant 0 : index
    %c0_0 = arith.constant 0 : index
    %0 = vector.load %arg1[%c0, %c0_0] : memref<8x128xf32, #tpu.memory_space<vmem>>, vector<8x128xf32>
    %1 = arith.truncf %0 : vector<8x128xf32> to vector<8x128xbf16>
    %c0_1 = arith.constant 0 : index
    %c0_2 = arith.constant 0 : index
    %2 = vector.load %arg2[%c0_1, %c0_2] : memref<128x128xbf16, #tpu.memory_space<vmem>>, vector<128x128xbf16>
    %cst = arith.constant dense<0.000000e+00> : vector<8x128xf32>
    %3 = tpu.matmul %1, %2, %cst {dimension_numbers = #tpu.dot_dimension_numbers<[1], [0], [0], [1], [0, 0, 1, 1], [], []>} : vector<8x128xbf16>, vector<128x128xbf16>, vector<8x128xf32> -> vector<8x128xf32>
    %c0_3 = arith.constant 0 : index
    %c0_4 = arith.constant 0 : index
    %4 = vector.load %arg3[%c0_3, %c0_4] : memref<1x128xf32, #tpu.memory_space<vmem>>, vector<1x128xf32>
    %5 = vector.broadcast %4 : vector<1x128xf32> to vector<8x128xf32>
    %6 = arith.addf %3, %5 : vector<8x128xf32>
    %cst_5 = arith.constant 0.000000e+00 : f32
    %7 = vector.broadcast %cst_5 : f32 to vector<8x128xf32>
    %8 = arith.maximumf %6, %7 : vector<8x128xf32>
    %c0_6 = arith.constant 0 : index
    %c0_7 = arith.constant 0 : index
    %9 = vector.load %arg4[%c0_6, %c0_7] : memref<1x128xf32, #tpu.memory_space<vmem>>, vector<1x128xf32>
    %c0_8 = arith.constant 0 : index
    %c0_9 = arith.constant 0 : index
    %10 = vector.load %arg5[%c0_8, %c0_9] : memref<1x128xf32, #tpu.memory_space<vmem>>, vector<1x128xf32>
    %cst_10 = arith.constant dense<0.000000e+00> : vector<8xf32>
    %11 = vector.multi_reduction <add>, %8, %cst_10 [1] : vector<8x128xf32> to vector<8xf32>
    %12 = vector.shape_cast %11 : vector<8xf32> to vector<8x1xf32>
    %cst_11 = arith.constant 3.125000e-02 : f32
    %13 = vector.broadcast %cst_11 : f32 to vector<8x1xf32>
    %14 = arith.mulf %12, %13 : vector<8x1xf32>
    %15 = tpu.iota {dimensions = array<i32: 1>} : vector<8x128xi32>
    %c32_i32 = arith.constant 32 : i32
    %16 = vector.broadcast %c32_i32 : i32 to vector<8x128xi32>
    %17 = arith.cmpi slt, %15, %16 : vector<8x128xi32>
    %18 = vector.broadcast %14 : vector<8x1xf32> to vector<8x128xf32>
    %19 = arith.subf %8, %18 : vector<8x128xf32>
    %cst_12 = arith.constant 0.000000e+00 : f32
    %20 = vector.broadcast %cst_12 : f32 to vector<8x128xf32>
    %21 = arith.select %17, %19, %20 : vector<8x128xi1>, vector<8x128xf32>
    %22 = arith.mulf %21, %21 : vector<8x128xf32>
    %cst_13 = arith.constant dense<0.000000e+00> : vector<8xf32>
    %23 = vector.multi_reduction <add>, %22, %cst_13 [1] : vector<8x128xf32> to vector<8xf32>
    %24 = vector.shape_cast %23 : vector<8xf32> to vector<8x1xf32>
    %cst_14 = arith.constant 3.125000e-02 : f32
    %25 = vector.broadcast %cst_14 : f32 to vector<8x1xf32>
    %26 = arith.mulf %24, %25 : vector<8x1xf32>
    %cst_15 = arith.constant 9.99999974E-6 : f32
    %27 = vector.broadcast %cst_15 : f32 to vector<8x1xf32>
    %28 = arith.addf %26, %27 : vector<8x1xf32>
    %29 = math.rsqrt %28 : vector<8x1xf32>
    %30 = vector.broadcast %29 : vector<8x1xf32> to vector<8x128xf32>
    %31 = arith.mulf %21, %30 : vector<8x128xf32>
    %32 = vector.broadcast %9 : vector<1x128xf32> to vector<8x128xf32>
    %33 = arith.mulf %31, %32 : vector<8x128xf32>
    %34 = vector.broadcast %10 : vector<1x128xf32> to vector<8x128xf32>
    %35 = arith.addf %33, %34 : vector<8x128xf32>
    %36 = arith.truncf %35 : vector<8x128xf32> to vector<8x128xbf16>
    %c0_16 = arith.constant 0 : index
    %c0_17 = arith.constant 0 : index
    %37 = vector.load %arg6[%c0_16, %c0_17] : memref<128x128xbf16, #tpu.memory_space<vmem>>, vector<128x128xbf16>
    %cst_18 = arith.constant dense<0.000000e+00> : vector<8x128xf32>
    %38 = tpu.matmul %36, %37, %cst_18 {dimension_numbers = #tpu.dot_dimension_numbers<[1], [0], [0], [1], [0, 0, 1, 1], [], []>} : vector<8x128xbf16>, vector<128x128xbf16>, vector<8x128xf32> -> vector<8x128xf32>
    %c0_19 = arith.constant 0 : index
    %c0_20 = arith.constant 0 : index
    %39 = vector.load %arg7[%c0_19, %c0_20] : memref<1x128xf32, #tpu.memory_space<vmem>>, vector<1x128xf32>
    %40 = vector.broadcast %39 : vector<1x128xf32> to vector<8x128xf32>
    %41 = arith.addf %38, %40 : vector<8x128xf32>
    %cst_21 = arith.constant 0.000000e+00 : f32
    %42 = vector.broadcast %cst_21 : f32 to vector<8x128xf32>
    %43 = arith.maximumf %41, %42 : vector<8x128xf32>
    %c0_22 = arith.constant 0 : index
    %c0_23 = arith.constant 0 : index
    %44 = vector.load %arg8[%c0_22, %c0_23] : memref<1x128xf32, #tpu.memory_space<vmem>>, vector<1x128xf32>
    %c0_24 = arith.constant 0 : index
    %c0_25 = arith.constant 0 : index
    %45 = vector.load %arg9[%c0_24, %c0_25] : memref<1x128xf32, #tpu.memory_space<vmem>>, vector<1x128xf32>
    %cst_26 = arith.constant dense<0.000000e+00> : vector<8xf32>
    %46 = vector.multi_reduction <add>, %43, %cst_26 [1] : vector<8x128xf32> to vector<8xf32>
    %47 = vector.shape_cast %46 : vector<8xf32> to vector<8x1xf32>
    %cst_27 = arith.constant 3.125000e-02 : f32
    %48 = vector.broadcast %cst_27 : f32 to vector<8x1xf32>
    %49 = arith.mulf %47, %48 : vector<8x1xf32>
    %50 = tpu.iota {dimensions = array<i32: 1>} : vector<8x128xi32>
    %c32_i32_28 = arith.constant 32 : i32
    %51 = vector.broadcast %c32_i32_28 : i32 to vector<8x128xi32>
    %52 = arith.cmpi slt, %50, %51 : vector<8x128xi32>
    %53 = vector.broadcast %49 : vector<8x1xf32> to vector<8x128xf32>
    %54 = arith.subf %43, %53 : vector<8x128xf32>
    %cst_29 = arith.constant 0.000000e+00 : f32
    %55 = vector.broadcast %cst_29 : f32 to vector<8x128xf32>
    %56 = arith.select %52, %54, %55 : vector<8x128xi1>, vector<8x128xf32>
    %57 = arith.mulf %56, %56 : vector<8x128xf32>
    %cst_30 = arith.constant dense<0.000000e+00> : vector<8xf32>
    %58 = vector.multi_reduction <add>, %57, %cst_30 [1] : vector<8x128xf32> to vector<8xf32>
    %59 = vector.shape_cast %58 : vector<8xf32> to vector<8x1xf32>
    %cst_31 = arith.constant 3.125000e-02 : f32
    %60 = vector.broadcast %cst_31 : f32 to vector<8x1xf32>
    %61 = arith.mulf %59, %60 : vector<8x1xf32>
    %cst_32 = arith.constant 9.99999974E-6 : f32
    %62 = vector.broadcast %cst_32 : f32 to vector<8x1xf32>
    %63 = arith.addf %61, %62 : vector<8x1xf32>
    %64 = math.rsqrt %63 : vector<8x1xf32>
    %65 = vector.broadcast %64 : vector<8x1xf32> to vector<8x128xf32>
    %66 = arith.mulf %56, %65 : vector<8x128xf32>
    %67 = vector.broadcast %44 : vector<1x128xf32> to vector<8x128xf32>
    %68 = arith.mulf %66, %67 : vector<8x128xf32>
    %69 = vector.broadcast %45 : vector<1x128xf32> to vector<8x128xf32>
    %70 = arith.addf %68, %69 : vector<8x128xf32>
    %71 = arith.truncf %70 : vector<8x128xf32> to vector<8x128xbf16>
    %c0_33 = arith.constant 0 : index
    %c0_34 = arith.constant 0 : index
    %72 = vector.load %arg10[%c0_33, %c0_34] : memref<128x128xbf16, #tpu.memory_space<vmem>>, vector<128x128xbf16>
    %cst_35 = arith.constant dense<0.000000e+00> : vector<8x128xf32>
    %73 = tpu.matmul %71, %72, %cst_35 {dimension_numbers = #tpu.dot_dimension_numbers<[1], [0], [0], [1], [0, 0, 1, 1], [], []>} : vector<8x128xbf16>, vector<128x128xbf16>, vector<8x128xf32> -> vector<8x128xf32>
    %c0_36 = arith.constant 0 : index
    %c0_37 = arith.constant 0 : index
    %74 = vector.load %arg11[%c0_36, %c0_37] : memref<1x128xf32, #tpu.memory_space<vmem>>, vector<1x128xf32>
    %75 = vector.broadcast %74 : vector<1x128xf32> to vector<8x128xf32>
    %76 = arith.addf %73, %75 : vector<8x128xf32>
    %c0_38 = arith.constant 0 : index
    %c0_39 = arith.constant 0 : index
    %77 = vector.load %arg12[%c0_38, %c0_39] : memref<8x128xf32, #tpu.memory_space<vmem>>, vector<8x128xf32>
    tpu.vector_store %arg12[%c0_38, %c0_39], %76 {strides = array<i32>} : memref<8x128xf32, #tpu.memory_space<vmem>>, vector<8x128xf32>,
    return
  }
  func.func @transform_0(%arg0: i32) -> (i32, i32) {
    %c0_i32 = arith.constant 0 : i32
    %c0_i32_0 = arith.constant 0 : i32
    return %arg0, %c0_i32 : i32, i32
  }
  func.func @transform_1(%arg0: i32) -> (i32, i32) {
    %c0_i32 = arith.constant 0 : i32
    %c0_i32_0 = arith.constant 0 : i32
    %c0_i32_1 = arith.constant 0 : i32
    return %c0_i32, %c0_i32_0 : i32, i32
  }
  func.func @transform_2(%arg0: i32) -> (i32, i32) {
    %c0_i32 = arith.constant 0 : i32
    %c0_i32_0 = arith.constant 0 : i32
    %c0_i32_1 = arith.constant 0 : i32
    return %c0_i32, %c0_i32_0 : i32, i32
  }
  func.func @transform_3(%arg0: i32) -> (i32, i32) {
    %c0_i32 = arith.constant 0 : i32
    %c0_i32_0 = arith.constant 0 : i32
    %c0_i32_1 = arith.constant 0 : i32
    return %c0_i32, %c0_i32_0 : i32, i32
  }
  func.func @transform_4(%arg0: i32) -> (i32, i32) {
    %c0_i32 = arith.constant 0 : i32
    %c0_i32_0 = arith.constant 0 : i32
    %c0_i32_1 = arith.constant 0 : i32
    return %c0_i32, %c0_i32_0 : i32, i32
  }
  func.func @transform_5(%arg0: i32) -> (i32, i32) {
    %c0_i32 = arith.constant 0 : i32
    %c0_i32_0 = arith.constant 0 : i32
    %c0_i32_1 = arith.constant 0 : i32
    return %c0_i32, %c0_i32_0 : i32, i32
  }
  func.func @transform_6(%arg0: i32) -> (i32, i32) {
    %c0_i32 = arith.constant 0 : i32
    %c0_i32_0 = arith.constant 0 : i32
    %c0_i32_1 = arith.constant 0 : i32
    return %c0_i32, %c0_i32_0 : i32, i32
  }
  func.func @transform_7(%arg0: i32) -> (i32, i32) {
    %c0_i32 = arith.constant 0 : i32
    %c0_i32_0 = arith.constant 0 : i32
    %c0_i32_1 = arith.constant 0 : i32
    return %c0_i32, %c0_i32_0 : i32, i32
  }
  func.func @transform_8(%arg0: i32) -> (i32, i32) {
    %c0_i32 = arith.constant 0 : i32
    %c0_i32_0 = arith.constant 0 : i32
    %c0_i32_1 = arith.constant 0 : i32
    return %c0_i32, %c0_i32_0 : i32, i32
  }
  func.func @transform_9(%arg0: i32) -> (i32, i32) {
    %c0_i32 = arith.constant 0 : i32
    %c0_i32_0 = arith.constant 0 : i32
    %c0_i32_1 = arith.constant 0 : i32
    return %c0_i32, %c0_i32_0 : i32, i32
  }
  func.func @transform_10(%arg0: i32) -> (i32, i32) {
    %c0_i32 = arith.constant 0 : i32
    %c0_i32_0 = arith.constant 0 : i32
    %c0_i32_1 = arith.constant 0 : i32
    return %c0_i32, %c0_i32_0 : i32, i32
  }
  func.func @transform_11(%arg0: i32) -> (i32, i32) {
    %c0_i32 = arith.constant 0 : i32
    %c0_i32_0 = arith.constant 0 : i32
    return %arg0, %c0_i32 : i32, i32
  }
}

</mosaic_0001>

<llo_original>
// kernel: _forward.1
$region0: #{_forward.1}
  #allocation0 [shape = 'u32[]', space=smem, size = 0x4, offset = 0x4, fixed_abs, tag = 'smem constant byte address 0x4 - core index']
  #allocation1 [shape = 'u32[144,128]{1,0:T(1,128)}', space=vmem, size = 0x12000, scoped, tag = 'internal scratch']
  %s0 = inlined_call_operand.vmem [shape: f32[8,128], index: 0, kind: input, shape index: {}]
  %s1 = inlined_call_operand.vmem [shape: bf16[128,128], index: 1, kind: input, shape index: {}]
  %s2 = inlined_call_operand.vmem [shape: f32[1,128], index: 2, kind: input, shape index: {}]
  %s3 = inlined_call_operand.vmem [shape: f32[1,128], index: 3, kind: input, shape index: {}]
  %s4 = inlined_call_operand.vmem [shape: f32[1,128], index: 4, kind: input, shape index: {}]
  %s5 = inlined_call_operand.vmem [shape: bf16[128,128], index: 5, kind: input, shape index: {}]
  %s6 = inlined_call_operand.vmem [shape: f32[1,128], index: 6, kind: input, shape index: {}]
  %s7 = inlined_call_operand.vmem [shape: f32[1,128], index: 7, kind: input, shape index: {}]
  %s8 = inlined_call_operand.vmem [shape: f32[1,128], index: 8, kind: input, shape index: {}]
  %s9 = inlined_call_operand.vmem [shape: bf16[128,128], index: 9, kind: input, shape index: {}]
  %s10 = inlined_call_operand.vmem [shape: f32[1,128], index: 10, kind: input, shape index: {}]
  %s11 = inlined_call_operand.vmem [shape: f32[8,128], index: 11, kind: output, shape index: {}]
  %s12 = sld [smem:[#allocation0]]
  $region54: #{_forward.1} parent=0
    _
  %s14 = ssub.s32 1, %s12
  %s15 = scalar_select 0, %s14, %s12
  // Predicated region
  $region2: #{_forward.1} parent=0 // pred_check
    _
  $region3: #{_forward.1} parent=0 // pred_check_branch
    %17 = sbr.rel (0) target = $region5
  $region4: #{_forward.1} parent=0 // pred_region
    _
  $region5: #{_forward.1} parent=0 // pred_fallthru
    _
  // Predicated region
  $region6: #{_forward.1} parent=0 // pred_check
    _
  $region7: #{_forward.1} parent=0 // pred_check_branch
    %19 = sbr.rel (0) target = $region9
  $region8: #{_forward.1} parent=0 // pred_region
    _
  $region9: #{_forward.1} parent=0 // pred_fallthru
    _
  // Predicated region
  $region10: #{_forward.1} parent=0 // pred_check
    _
  $region11: #{_forward.1} parent=0 // pred_check_branch
    %21 = sbr.rel (0) target = $region13
  $region12: #{_forward.1} parent=0 // pred_region
    _
  $region13: #{_forward.1} parent=0 // pred_fallthru
    _
  // Predicated region
  $region14: #{_forward.1} parent=0 // pred_check
    _
  $region15: #{_forward.1} parent=0 // pred_check_branch
    %23 = sbr.rel (0) target = $region17
  $region16: #{_forward.1} parent=0 // pred_region
    _
  $region17: #{_forward.1} parent=0 // pred_fallthru
    _
  // Predicated region
  $region18: #{_forward.1} parent=0 // pred_check
    _
  $region19: #{_forward.1} parent=0 // pred_check_branch
    %25 = sbr.rel (0) target = $region21
  $region20: #{_forward.1} parent=0 // pred_region
    _
  $region21: #{_forward.1} parent=0 // pred_fallthru
    _
  // Predicated region
  $region22: #{_forward.1} parent=0 // pred_check
    _
  $region23: #{_forward.1} parent=0 // pred_check_branch
    %27 = sbr.rel (0) target = $region25
  $region24: #{_forward.1} parent=0 // pred_region
    _
  $region25: #{_forward.1} parent=0 // pred_fallthru
    _
  // Predicated region
  $region26: #{_forward.1} parent=0 // pred_check
    _
  $region27: #{_forward.1} parent=0 // pred_check_branch
    %29 = sbr.rel (0) target = $region29
  $region28: #{_forward.1} parent=0 // pred_region
    _
  $region29: #{_forward.1} parent=0 // pred_fallthru
    _
  // Predicated region
  $region30: #{_forward.1} parent=0 // pred_check
    _
  $region31: #{_forward.1} parent=0 // pred_check_branch
    %31 = sbr.rel (0) target = $region33
  $region32: #{_forward.1} parent=0 // pred_region
    _
  $region33: #{_forward.1} parent=0 // pred_fallthru
    _
  // Predicated region
  $region34: #{_forward.1} parent=0 // pred_check
    _
  $region35: #{_forward.1} parent=0 // pred_check_branch
    %33 = sbr.rel (0) target = $region37
  $region36: #{_forward.1} parent=0 // pred_region
    _
  $region37: #{_forward.1} parent=0 // pred_fallthru
    _
  // Predicated region
  $region38: #{_forward.1} parent=0 // pred_check
    _
  $region39: #{_forward.1} parent=0 // pred_check_branch
    %35 = sbr.rel (0) target = $region41
  $region40: #{_forward.1} parent=0 // pred_region
    _
  $region41: #{_forward.1} parent=0 // pred_fallthru
    _
  // Predicated region
  $region42: #{_forward.1} parent=0 // pred_check
    _
  $region43: #{_forward.1} parent=0 // pred_check_branch
    %37 = sbr.rel (0) target = $region45
  $region44: #{_forward.1} parent=0 // pred_region
    _
  $region45: #{_forward.1} parent=0 // pred_fallthru
    _
  %v39 = vld [vmem:[%s0] sm:$0xff]
  %v40 = vpack.c.bf16 %v39, %v39
  %v41 = vld [vmem:[%s1] sm:$0xf]
  %v42 = vld [vmem:[%s1 + $0x4] sm:$0xf]
  %v43 = vld [vmem:[%s1 + $0x8] sm:$0xf]
  %v44 = vld [vmem:[%s1 + $0xc] sm:$0xf]
  %v45 = vld [vmem:[%s1 + $0x10] sm:$0xf]
  %v46 = vld [vmem:[%s1 + $0x14] sm:$0xf]
  %v47 = vld [vmem:[%s1 + $0x18] sm:$0xf]
  %v48 = vld [vmem:[%s1 + $0x1c] sm:$0xf]
  %v49 = vld [vmem:[%s1 + $0x20] sm:$0xf]
  %v50 = vld [vmem:[%s1 + $0x24] sm:$0xf]
  %v51 = vld [vmem:[%s1 + $0x28] sm:$0xf]
  %v52 = vld [vmem:[%s1 + $0x2c] sm:$0xf]
  %v53 = vld [vmem:[%s1 + $0x30] sm:$0xf]
  %v54 = vld [vmem:[%s1 + $0x34] sm:$0xf]
  %v55 = vld [vmem:[%s1 + $0x38] sm:$0xf]
  %v56 = vld [vmem:[%s1 + $0x3c] sm:$0xf]
  %v57 = vld [vmem:[%s2] sm:$0x1]
  %v59 = vlaneseq
  %v60 = vshrl.u32 %v59, 7
  %v61 = vsub.s32 0, %v60
  %v62 = vrot.slane %v57, %v61
  %v80 = vunpack.c.l.b16 %v41
  %v81 = vunpack.c.l.b16 %v42
  %v82 = vunpack.c.l.b16 %v43
  %v83 = vunpack.c.l.b16 %v44
  %v84 = vunpack.c.l.b16 %v45
  %v85 = vunpack.c.l.b16 %v46
  %v86 = vunpack.c.l.b16 %v47
  %v87 = vunpack.c.l.b16 %v48
  %v88 = vunpack.c.l.b16 %v49
  %v89 = vunpack.c.l.b16 %v50
  %v90 = vunpack.c.l.b16 %v51
  %v91 = vunpack.c.l.b16 %v52
  %v92 = vunpack.c.l.b16 %v53
  %v93 = vunpack.c.l.b16 %v54
  %v94 = vunpack.c.l.b16 %v55
  %v95 = vunpack.c.l.b16 %v56
  %v96 = vpack.c.b16 %v81, %v80
  %v97 = vpack.c.b16 %v83, %v82
  %v98 = vpack.c.b16 %v85, %v84
  %v99 = vpack.c.b16 %v87, %v86
  %v100 = vpack.c.b16 %v89, %v88
  %v101 = vpack.c.b16 %v91, %v90
  %v102 = vpack.c.b16 %v93, %v92
  %v103 = vpack.c.b16 %v95, %v94
  %112 = vmatprep.subr.bf16.mxu0 0
  %113 = vmatpush1.bf16.msra.mxu0 %v103
  %114 = vmatprep.subr.bf16.mxu0 0
  %115 = vmatpush1.bf16.msra.mxu0 %v102
  %116 = vmatprep.subr.bf16.mxu0 0
  %117 = vmatpush1.bf16.msra.mxu0 %v101
  %118 = vmatprep.subr.bf16.mxu0 0
  %119 = vmatpush1.bf16.msra.mxu0 %v100
  %120 = vmatprep.subr.bf16.mxu0 0
  %121 = vmatpush1.bf16.msra.mxu0 %v99
  %122 = vmatprep.subr.bf16.mxu0 0
  %123 = vmatpush1.bf16.msra.mxu0 %v98
  %124 = vmatprep.subr.bf16.mxu0 0
  %125 = vmatpush1.bf16.msra.mxu0 %v97
  %126 = vmatprep.subr.bf16.mxu0 0
  %127 = vmatpush1.bf16.msra.mxu0 %v96
  %128 = vmatprep.subr.bf16.mxu0 0
  %129 = vmatpush2.bf16.msra.mxu0 0
  %130 = vmatprep.subr.bf16.mxu0 0
  %131 = vmatpush2.bf16.msra.mxu0 0
  %132 = vmatprep.subr.bf16.mxu0 0
  %133 = vmatpush2.bf16.msra.mxu0 0
  %134 = vmatprep.subr.bf16.mxu0 0
  %135 = vmatpush2.bf16.msra.mxu0 0
  %136 = vmatprep.subr.bf16.mxu0 0
  %137 = vmatpush2.bf16.msra.mxu0 0
  %138 = vmatprep.subr.bf16.mxu0 0
  %139 = vmatpush2.bf16.msra.mxu0 0
  %140 = vmatprep.subr.bf16.mxu0 0
  %141 = vmatpush2.bf16.msra.mxu0 0
  %142 = vmatprep.subr.bf16.mxu0 0
  %143 = vmatpush2.bf16.msra.mxu0 0
  %144 = vmatprep.mubr.bf16.mxu0 0
  %145 = vmatmul.mubr.bf16.gmra.mxu0 %v40
  %v146 = vpop.f32.mrf.mxu0
  %v147 = vadd.f32 %v62, %v146
  %v148 = vpop.f32.mrf.mxu0
  %v149 = vpop.f32.mrf.mxu0
  %v150 = vpop.f32.mrf.mxu0
  %151 = vdwg.mxu0
  %v152 = vmax.f32 %v147, 0.0
  %v153 = vld [vmem:[%s3] sm:$0x1]
  %v154 = vld [vmem:[%s4] sm:$0x1]
  %155 = vadd.xlane.f32.xlu0 %v152
  %v156 = vpop.xlane.xlu0 %155
  %v157 = vmul.f32 %v156, 0.03125
  %v158 = vlaneseq
  %v159 = vand.u32 %v158, 127
  %vm160 = vcmp.lt.s32.totalorder %v159, 32
  %v161 = vsub.f32 %v152, %v157
  %v162 = vsel %vm160, %v161, 0.0
  %v163 = vmul.f32 %v162, %v162
  %164 = vadd.xlane.f32.xlu0 %v163
  %v165 = vpop.xlane.xlu0 %164
  %v166 = vmul.f32 %v165, 0.03125
  %v167 = vadd.f32 %v166, 1e-05
  %v168 = vrsqrt.pop %v167
  %v169 = vmul.f32 %v162, %v168
  %v171 = vlaneseq
  %v172 = vshrl.u32 %v171, 7
  %v173 = vsub.s32 0, %v172
  %v174 = vrot.slane %v153, %v173
  %v176 = vmul.f32 %v169, %v174
  %v178 = vlaneseq
  %v179 = vshrl.u32 %v178, 7
  %v180 = vsub.s32 0, %v179
  %v181 = vrot.slane %v154, %v180
  %v183 = vadd.f32 %v176, %v181
  %v184 = vpack.c.bf16 %v183, %v183
  %v185 = vld [vmem:[%s5] sm:$0xf]
  %v186 = vld [vmem:[%s5 + $0x4] sm:$0xf]
  %v187 = vld [vmem:[%s5 + $0x8] sm:$0xf]
  %v188 = vld [vmem:[%s5 + $0xc] sm:$0xf]
  %v189 = vld [vmem:[%s5 + $0x10] sm:$0xf]
  %v190 = vld [vmem:[%s5 + $0x14] sm:$0xf]
  %v191 = vld [vmem:[%s5 + $0x18] sm:$0xf]
  %v192 = vld [vmem:[%s5 + $0x1c] sm:$0xf]
  %v193 = vld [vmem:[%s5 + $0x20] sm:$0xf]
  %v194 = vld [vmem:[%s5 + $0x24] sm:$0xf]
  %v195 = vld [vmem:[%s5 + $0x28] sm:$0xf]
  %v196 = vld [vmem:[%s5 + $0x2c] sm:$0xf]
  %v197 = vld [vmem:[%s5 + $0x30] sm:$0xf]
  %v198 = vld [vmem:[%s5 + $0x34] sm:$0xf]
  %v199 = vld [vmem:[%s5 + $0x38] sm:$0xf]
  %v200 = vld [vmem:[%s5 + $0x3c] sm:$0xf]
  %v201 = vld [vmem:[%s6] sm:$0x1]
  %v203 = vlaneseq
  %v204 = vshrl.u32 %v203, 7
  %v205 = vsub.s32 0, %v204
  %v206 = vrot.slane %v201, %v205
  %v224 = vunpack.c.l.b16 %v185
  %v225 = vunpack.c.l.b16 %v186
  %v226 = vunpack.c.l.b16 %v187
  %v227 = vunpack.c.l.b16 %v188
  %v228 = vunpack.c.l.b16 %v189
  %v229 = vunpack.c.l.b16 %v190
  %v230 = vunpack.c.l.b16 %v191
  %v231 = vunpack.c.l.b16 %v192
  %v232 = vunpack.c.l.b16 %v193
  %v233 = vunpack.c.l.b16 %v194
  %v234 = vunpack.c.l.b16 %v195
  %v235 = vunpack.c.l.b16 %v196
  %v236 = vunpack.c.l.b16 %v197
  %v237 = vunpack.c.l.b16 %v198
  %v238 = vunpack.c.l.b16 %v199
  %v239 = vunpack.c.l.b16 %v200
  %v240 = vpack.c.b16 %v225, %v224
  %v241 = vpack.c.b16 %v227, %v226
  %v242 = vpack.c.b16 %v229, %v228
  %v243 = vpack.c.b16 %v231, %v230
  %v244 = vpack.c.b16 %v233, %v232
  %v245 = vpack.c.b16 %v235, %v234
  %v246 = vpack.c.b16 %v237, %v236
  %v247 = vpack.c.b16 %v239, %v238
  %256 = vmatprep.subr.bf16.mxu0 0
  %257 = vmatpush1.bf16.msra.mxu0 %v247
  %258 = vmatprep.subr.bf16.mxu0 0
  %259 = vmatpush1.bf16.msra.mxu0 %v246
  %260 = vmatprep.subr.bf16.mxu0 0
  %261 = vmatpush1.bf16.msra.mxu0 %v245
  %262 = vmatprep.subr.bf16.mxu0 0
  %263 = vmatpush1.bf16.msra.mxu0 %v244
  %264 = vmatprep.subr.bf16.mxu0 0
  %265 = vmatpush1.bf16.msra.mxu0 %v243
  %266 = vmatprep.subr.bf16.mxu0 0
  %267 = vmatpush1.bf16.msra.mxu0 %v242
  %268 = vmatprep.subr.bf16.mxu0 0
  %269 = vmatpush1.bf16.msra.mxu0 %v241
  %270 = vmatprep.subr.bf16.mxu0 0
  %271 = vmatpush1.bf16.msra.mxu0 %v240
  %272 = vmatprep.subr.bf16.mxu0 0
  %273 = vmatpush2.bf16.msra.mxu0 0
  %274 = vmatprep.subr.bf16.mxu0 0
  %275 = vmatpush2.bf16.msra.mxu0 0
  %276 = vmatprep.subr.bf16.mxu0 0
  %277 = vmatpush2.bf16.msra.mxu0 0
  %278 = vmatprep.subr.bf16.mxu0 0
  %279 = vmatpush2.bf16.msra.mxu0 0
  %280 = vmatprep.subr.bf16.mxu0 0
  %281 = vmatpush2.bf16.msra.mxu0 0
  %282 = vmatprep.subr.bf16.mxu0 0
  %283 = vmatpush2.bf16.msra.mxu0 0
  %284 = vmatprep.subr.bf16.mxu0 0
  %285 = vmatpush2.bf16.msra.mxu0 0
  %286 = vmatprep.subr.bf16.mxu0 0
  %287 = vmatpush2.bf16.msra.mxu0 0
  %288 = vmatprep.mubr.bf16.mxu0 0
  %289 = vmatmul.mubr.bf16.gmra.mxu0 %v184
  %v290 = vpop.f32.mrf.mxu0
  %v291 = vadd.f32 %v206, %v290
  %v292 = vpop.f32.mrf.mxu0
  %v293 = vpop.f32.mrf.mxu0
  %v294 = vpop.f32.mrf.mxu0
  %295 = vdwg.mxu0
  %v296 = vmax.f32 %v291, 0.0
  %v297 = vld [vmem:[%s7] sm:$0x1]
  %v298 = vld [vmem:[%s8] sm:$0x1]
  %299 = vadd.xlane.f32.xlu0 %v296
  %v300 = vpop.xlane.xlu0 %299
  %v301 = vmul.f32 %v300, 0.03125
  %v302 = vsub.f32 %v296, %v301
  %v303 = vsel %vm160, %v302, 0.0
  %v304 = vmul.f32 %v303, %v303
  %305 = vadd.xlane.f32.xlu0 %v304
  %v306 = vpop.xlane.xlu0 %305
  %v307 = vmul.f32 %v306, 0.03125
  %v308 = vadd.f32 %v307, 1e-05
  %v309 = vrsqrt.pop %v308
  %v310 = vmul.f32 %v303, %v309
  %v312 = vlaneseq
  %v313 = vshrl.u32 %v312, 7
  %v314 = vsub.s32 0, %v313
  %v315 = vrot.slane %v297, %v314
  %v317 = vmul.f32 %v310, %v315
  %v319 = vlaneseq
  %v320 = vshrl.u32 %v319, 7
  %v321 = vsub.s32 0, %v320
  %v322 = vrot.slane %v298, %v321
  %v324 = vadd.f32 %v317, %v322
  %v325 = vpack.c.bf16 %v324, %v324
  %v326 = vld [vmem:[%s9] sm:$0xf]
  %v327 = vld [vmem:[%s9 + $0x4] sm:$0xf]
  %v328 = vld [vmem:[%s9 + $0x8] sm:$0xf]
  %v329 = vld [vmem:[%s9 + $0xc] sm:$0xf]
  %v330 = vld [vmem:[%s9 + $0x10] sm:$0xf]
  %v331 = vld [vmem:[%s9 + $0x14] sm:$0xf]
  %v332 = vld [vmem:[%s9 + $0x18] sm:$0xf]
  %v333 = vld [vmem:[%s9 + $0x1c] sm:$0xf]
  %v334 = vld [vmem:[%s9 + $0x20] sm:$0xf]
  %v335 = vld [vmem:[%s9 + $0x24] sm:$0xf]
  %v336 = vld [vmem:[%s9 + $0x28] sm:$0xf]
  %v337 = vld [vmem:[%s9 + $0x2c] sm:$0xf]
  %v338 = vld [vmem:[%s9 + $0x30] sm:$0xf]
  %v339 = vld [vmem:[%s9 + $0x34] sm:$0xf]
  %v340 = vld [vmem:[%s9 + $0x38] sm:$0xf]
  %v341 = vld [vmem:[%s9 + $0x3c] sm:$0xf]
  %v342 = vld [vmem:[%s10] sm:$0x1]
  %v344 = vlaneseq
  %v345 = vshrl.u32 %v344, 7
  %v346 = vsub.s32 0, %v345
  %v347 = vrot.slane %v342, %v346
  %v365 = vunpack.c.l.b16 %v326
  %v366 = vunpack.c.l.b16 %v327
  %v367 = vunpack.c.l.b16 %v328
  %v368 = vunpack.c.l.b16 %v329
  %v369 = vunpack.c.l.b16 %v330
  %v370 = vunpack.c.l.b16 %v331
  %v371 = vunpack.c.l.b16 %v332
  %v372 = vunpack.c.l.b16 %v333
  %v373 = vunpack.c.l.b16 %v334
  %v374 = vunpack.c.l.b16 %v335
  %v375 = vunpack.c.l.b16 %v336
  %v376 = vunpack.c.l.b16 %v337
  %v377 = vunpack.c.l.b16 %v338
  %v378 = vunpack.c.l.b16 %v339
  %v379 = vunpack.c.l.b16 %v340
  %v380 = vunpack.c.l.b16 %v341
  %v381 = vpack.c.b16 %v366, %v365
  %v382 = vpack.c.b16 %v368, %v367
  %v383 = vpack.c.b16 %v370, %v369
  %v384 = vpack.c.b16 %v372, %v371
  %v385 = vpack.c.b16 %v374, %v373
  %v386 = vpack.c.b16 %v376, %v375
  %v387 = vpack.c.b16 %v378, %v377
  %v388 = vpack.c.b16 %v380, %v379
  %397 = vmatprep.subr.bf16.mxu0 0
  %398 = vmatpush1.bf16.msra.mxu0 %v388
  %399 = vmatprep.subr.bf16.mxu0 0
  %400 = vmatpush1.bf16.msra.mxu0 %v387
  %401 = vmatprep.subr.bf16.mxu0 0
  %402 = vmatpush1.bf16.msra.mxu0 %v386
  %403 = vmatprep.subr.bf16.mxu0 0
  %404 = vmatpush1.bf16.msra.mxu0 %v385
  %405 = vmatprep.subr.bf16.mxu0 0
  %406 = vmatpush1.bf16.msra.mxu0 %v384
  %407 = vmatprep.subr.bf16.mxu0 0
  %408 = vmatpush1.bf16.msra.mxu0 %v383
  %409 = vmatprep.subr.bf16.mxu0 0
  %410 = vmatpush1.bf16.msra.mxu0 %v382
  %411 = vmatprep.subr.bf16.mxu0 0
  %412 = vmatpush1.bf16.msra.mxu0 %v381
  %413 = vmatprep.subr.bf16.mxu0 0
  %414 = vmatpush2.bf16.msra.mxu0 0
  %415 = vmatprep.subr.bf16.mxu0 0
  %416 = vmatpush2.bf16.msra.mxu0 0
  %417 = vmatprep.subr.bf16.mxu0 0
  %418 = vmatpush2.bf16.msra.mxu0 0
  %419 = vmatprep.subr.bf16.mxu0 0
  %420 = vmatpush2.bf16.msra.mxu0 0
  %421 = vmatprep.subr.bf16.mxu0 0
  %422 = vmatpush2.bf16.msra.mxu0 0
  %423 = vmatprep.subr.bf16.mxu0 0
  %424 = vmatpush2.bf16.msra.mxu0 0
  %425 = vmatprep.subr.bf16.mxu0 0
  %426 = vmatpush2.bf16.msra.mxu0 0
  %427 = vmatprep.subr.bf16.mxu0 0
  %428 = vmatpush2.bf16.msra.mxu0 0
  %429 = vmatprep.mubr.bf16.mxu0 0
  %430 = vmatmul.mubr.bf16.gmra.mxu0 %v325
  %v431 = vpop.f32.mrf.mxu0
  %v432 = vadd.f32 %v347, %v431
  %v433 = vpop.f32.mrf.mxu0
  %v434 = vpop.f32.mrf.mxu0
  %v435 = vpop.f32.mrf.mxu0
  %436 = vdwg.mxu0
  %437 = vst [vmem:[%s11] sm:$0xff] %v432
  // Predicated region
  $region46: #{_forward.1} parent=0 // pred_check
    _
  $region47: #{_forward.1} parent=0 // pred_check_branch
    %439 = sbr.rel (0) target = $region49
  $region48: #{_forward.1} parent=0 // pred_region
    _
  $region49: #{_forward.1} parent=0 // pred_fallthru
    _
  // Predicated region
  $region50: #{_forward.1} parent=0 // pred_check
    _
  $region51: #{_forward.1} parent=0 // pred_check_branch
    %441 = sbr.rel (0) target = $region53
  $region52: #{_forward.1} parent=0 // pred_region
    _
  $region53: #{_forward.1} parent=0 // pred_fallthru
    _

// kernel: _forward.1
$region0: #{_forward.1}
  #allocation0 [shape = 'u32[]', space=smem, size = 0x4, offset = 0x4, fixed_abs, tag = 'smem constant byte address 0x4 - core index']
  #allocation1 [shape = 'u32[144,128]{1,0:T(1,128)}', space=vmem, size = 0x12000, scoped, tag = 'internal scratch']
  %s0 = inlined_call_operand.vmem [shape: f32[8,128], index: 0, kind: input, shape index: {}]
  %s1 = inlined_call_operand.vmem [shape: bf16[128,128], index: 1, kind: input, shape index: {}]
  %s2 = inlined_call_operand.vmem [shape: f32[1,128], index: 2, kind: input, shape index: {}]
  %s3 = inlined_call_operand.vmem [shape: f32[1,128], index: 3, kind: input, shape index: {}]
  %s4 = inlined_call_operand.vmem [shape: f32[1,128], index: 4, kind: input, shape index: {}]
  %s5 = inlined_call_operand.vmem [shape: bf16[128,128], index: 5, kind: input, shape index: {}]
  %s6 = inlined_call_operand.vmem [shape: f32[1,128], index: 6, kind: input, shape index: {}]
  %s7 = inlined_call_operand.vmem [shape: f32[1,128], index: 7, kind: input, shape index: {}]
  %s8 = inlined_call_operand.vmem [shape: f32[1,128], index: 8, kind: input, shape index: {}]
  %s9 = inlined_call_operand.vmem [shape: bf16[128,128], index: 9, kind: input, shape index: {}]
  %s10 = inlined_call_operand.vmem [shape: f32[1,128], index: 10, kind: input, shape index: {}]
  %s11 = inlined_call_operand.vmem [shape: f32[8,128], index: 11, kind: output, shape index: {}]
  %s12 = sld [smem:[#allocation0]]
  $region54: #{_forward.1} parent=0
    _
  %s14 = ssub.s32 1, %s12
  %s15 = scalar_select 0, %s14, %s12
  // Predicated region
  $region2: #{_forward.1} parent=0 // pred_check
    _
  $region3: #{_forward.1} parent=0 // pred_check_branch
    %17 = sbr.rel (0) target = $region5
  $region4: #{_forward.1} parent=0 // pred_region
    _
  $region5: #{_forward.1} parent=0 // pred_fallthru
    _
  // Predicated region
  $region6: #{_forward.1} parent=0 // pred_check
    _
  $region7: #{_forward.1} parent=0 // pred_check_branch
    %19 = sbr.rel (0) target = $region9
  $region8: #{_forward.1} parent=0 // pred_region
    _
  $region9: #{_forward.1} parent=0 // pred_fallthru
    _
  // Predicated region
  $region10: #{_forward.1} parent=0 // pred_check
    _
  $region11: #{_forward.1} parent=0 // pred_check_branch
    %21 = sbr.rel (0) target = $region13
  $region12: #{_forward.1} parent=0 // pred_region
    _
  $region13: #{_forward.1} parent=0 // pred_fallthru
    _
  // Predicated region
  $region14: #{_forward.1} parent=0 // pred_check
    _
  $region15: #{_forward.1} parent=0 // pred_check_branch
    %23 = sbr.rel (0) target = $region17
  $region16: #{_forward.1} parent=0 // pred_region
    _
  $region17: #{_forward.1} parent=0 // pred_fallthru
    _
  // Predicated region
  $region18: #{_forward.1} parent=0 // pred_check
    _
  $region19: #{_forward.1} parent=0 // pred_check_branch
    %25 = sbr.rel (0) target = $region21
  $region20: #{_forward.1} parent=0 // pred_region
    _
  $region21: #{_forward.1} parent=0 // pred_fallthru
    _
  // Predicated region
  $region22: #{_forward.1} parent=0 // pred_check
    _
  $region23: #{_forward.1} parent=0 // pred_check_branch
    %27 = sbr.rel (0) target = $region25
  $region24: #{_forward.1} parent=0 // pred_region
    _
  $region25: #{_forward.1} parent=0 // pred_fallthru
    _
  // Predicated region
  $region26: #{_forward.1} parent=0 // pred_check
    _
  $region27: #{_forward.1} parent=0 // pred_check_branch
    %29 = sbr.rel (0) target = $region29
  $region28: #{_forward.1} parent=0 // pred_region
    _
  $region29: #{_forward.1} parent=0 // pred_fallthru
    _
  // Predicated region
  $region30: #{_forward.1} parent=0 // pred_check
    _
  $region31: #{_forward.1} parent=0 // pred_check_branch
    %31 = sbr.rel (0) target = $region33
  $region32: #{_forward.1} parent=0 // pred_region
    _
  $region33: #{_forward.1} parent=0 // pred_fallthru
    _
  // Predicated region
  $region34: #{_forward.1} parent=0 // pred_check
    _
  $region35: #{_forward.1} parent=0 // pred_check_branch
    %33 = sbr.rel (0) target = $region37
  $region36: #{_forward.1} parent=0 // pred_region
    _
  $region37: #{_forward.1} parent=0 // pred_fallthru
    _
  // Predicated region
  $region38: #{_forward.1} parent=0 // pred_check
    _
  $region39: #{_forward.1} parent=0 // pred_check_branch
    %35 = sbr.rel (0) target = $region41
  $region40: #{_forward.1} parent=0 // pred_region
    _
  $region41: #{_forward.1} parent=0 // pred_fallthru
    _
  // Predicated region
  $region42: #{_forward.1} parent=0 // pred_check
    _
  $region43: #{_forward.1} parent=0 // pred_check_branch
    %37 = sbr.rel (0) target = $region45
  $region44: #{_forward.1} parent=0 // pred_region
    _
  $region45: #{_forward.1} parent=0 // pred_fallthru
    _
  %v39 = vld [vmem:[%s0] sm:$0xff]
  %v40 = vpack.c.bf16 %v39, %v39
  %v41 = vld [vmem:[%s1] sm:$0xf]
  %v42 = vld [vmem:[%s1 + $0x4] sm:$0xf]
  %v43 = vld [vmem:[%s1 + $0x8] sm:$0xf]
  %v44 = vld [vmem:[%s1 + $0xc] sm:$0xf]
  %v45 = vld [vmem:[%s1 + $0x10] sm:$0xf]
  %v46 = vld [vmem:[%s1 + $0x14] sm:$0xf]
  %v47 = vld [vmem:[%s1 + $0x18] sm:$0xf]
  %v48 = vld [vmem:[%s1 + $0x1c] sm:$0xf]
  %v49 = vld [vmem:[%s1 + $0x20] sm:$0xf]
  %v50 = vld [vmem:[%s1 + $0x24] sm:$0xf]
  %v51 = vld [vmem:[%s1 + $0x28] sm:$0xf]
  %v52 = vld [vmem:[%s1 + $0x2c] sm:$0xf]
  %v53 = vld [vmem:[%s1 + $0x30] sm:$0xf]
  %v54 = vld [vmem:[%s1 + $0x34] sm:$0xf]
  %v55 = vld [vmem:[%s1 + $0x38] sm:$0xf]
  %v56 = vld [vmem:[%s1 + $0x3c] sm:$0xf]
  %v57 = vld [vmem:[%s2] sm:$0x1]
  %v59 = vlaneseq
  %v60 = vshrl.u32 %v59, 7
  %v61 = vsub.s32 0, %v60
  %v62 = vrot.slane %v57, %v61
  %v80 = vunpack.c.l.b16 %v41
  %v81 = vunpack.c.l.b16 %v42
  %v82 = vunpack.c.l.b16 %v43
  %v83 = vunpack.c.l.b16 %v44
  %v84 = vunpack.c.l.b16 %v45
  %v85 = vunpack.c.l.b16 %v46
  %v86 = vunpack.c.l.b16 %v47
  %v87 = vunpack.c.l.b16 %v48
  %v88 = vunpack.c.l.b16 %v49
  %v89 = vunpack.c.l.b16 %v50
  %v90 = vunpack.c.l.b16 %v51
  %v91 = vunpack.c.l.b16 %v52
  %v92 = vunpack.c.l.b16 %v53
  %v93 = vunpack.c.l.b16 %v54
  %v94 = vunpack.c.l.b16 %v55
  %v95 = vunpack.c.l.b16 %v56
  %v96 = vpack.c.b16 %v81, %v80
  %v97 = vpack.c.b16 %v83, %v82
  %v98 = vpack.c.b16 %v85, %v84
  %v99 = vpack.c.b16 %v87, %v86
  %v100 = vpack.c.b16 %v89, %v88
  %v101 = vpack.c.b16 %v91, %v90
  %v102 = vpack.c.b16 %v93, %v92
  %v103 = vpack.c.b16 %v95, %v94
  %112 = vmatprep.subr.bf16.mxu0 0
  %113 = vmatpush1.bf16.msra.mxu0 %v103
  %114 = vmatprep.subr.bf16.mxu0 0
  %115 = vmatpush1.bf16.msra.mxu0 %v102
  %116 = vmatprep.subr.bf16.mxu0 0
  %117 = vmatpush1.bf16.msra.mxu0 %v101
  %118 = vmatprep.subr.bf16.mxu0 0
  %119 = vmatpush1.bf16.msra.mxu0 %v100
  %120 = vmatprep.subr.bf16.mxu0 0
  %121 = vmatpush1.bf16.msra.mxu0 %v99
  %122 = vmatprep.subr.bf16.mxu0 0
  %123 = vmatpush1.bf16.msra.mxu0 %v98
  %124 = vmatprep.subr.bf16.mxu0 0
  %125 = vmatpush1.bf16.msra.mxu0 %v97
  %126 = vmatprep.subr.bf16.mxu0 0
  %127 = vmatpush1.bf16.msra.mxu0 %v96
  %128 = vmatprep.subr.bf16.mxu0 0
  %129 = vmatpush2.bf16.msra.mxu0 0
  %130 = vmatprep.subr.bf16.mxu0 0
  %131 = vmatpush2.bf16.msra.mxu0 0
  %132 = vmatprep.subr.bf16.mxu0 0
  %133 = vmatpush2.bf16.msra.mxu0 0
  %134 = vmatprep.subr.bf16.mxu0 0
  %135 = vmatpush2.bf16.msra.mxu0 0
  %136 = vmatprep.subr.bf16.mxu0 0
  %137 = vmatpush2.bf16.msra.mxu0 0
  %138 = vmatprep.subr.bf16.mxu0 0
  %139 = vmatpush2.bf16.msra.mxu0 0
  %140 = vmatprep.subr.bf16.mxu0 0
  %141 = vmatpush2.bf16.msra.mxu0 0
  %142 = vmatprep.subr.bf16.mxu0 0
  %143 = vmatpush2.bf16.msra.mxu0 0
  %144 = vmatprep.mubr.bf16.mxu0 0
  %145 = vmatmul.mubr.bf16.gmra.mxu0 %v40
  %v146 = vpop.f32.mrf.mxu0
  %v147 = vadd.f32 %v62, %v146
  %v148 = vpop.f32.mrf.mxu0
  %v149 = vpop.f32.mrf.mxu0
  %v150 = vpop.f32.mrf.mxu0
  %151 = vdwg.mxu0
  %v152 = vmax.f32 %v147, 0.0
  %v153 = vld [vmem:[%s3] sm:$0x1]
  %v154 = vld [vmem:[%s4] sm:$0x1]
  %155 = vadd.xlane.f32.xlu0 %v152
  %v156 = vpop.xlane.xlu0 %155
  %v157 = vmul.f32 %v156, 0.03125
  %v158 = vlaneseq
  %v159 = vand.u32 %v158, 127
  %vm160 = vcmp.lt.s32.totalorder %v159, 32
  %v161 = vsub.f32 %v152, %v157
  %v162 = vsel %vm160, %v161, 0.0
  %v163 = vmul.f32 %v162, %v162
  %164 = vadd.xlane.f32.xlu0 %v163
  %v165 = vpop.xlane.xlu0 %164
  %v166 = vmul.f32 %v165, 0.03125
  %v167 = vadd.f32 %v166, 1e-05
  %v168 = vrsqrt.pop %v167
  %v169 = vmul.f32 %v162, %v168
  %v171 = vlaneseq
  %v172 = vshrl.u32 %v171, 7
  %v173 = vsub.s32 0, %v172
  %v174 = vrot.slane %v153, %v173
  %v176 = vmul.f32 %v169, %v174
  %v178 = vlaneseq
  %v179 = vshrl.u32 %v178, 7
  %v180 = vsub.s32 0, %v179
  %v181 = vrot.slane %v154, %v180
  %v183 = vadd.f32 %v176, %v181
  %v184 = vpack.c.bf16 %v183, %v183
  %v185 = vld [vmem:[%s5] sm:$0xf]
  %v186 = vld [vmem:[%s5 + $0x4] sm:$0xf]
  %v187 = vld [vmem:[%s5 + $0x8] sm:$0xf]
  %v188 = vld [vmem:[%s5 + $0xc] sm:$0xf]
  %v189 = vld [vmem:[%s5 + $0x10] sm:$0xf]
  %v190 = vld [vmem:[%s5 + $0x14] sm:$0xf]
  %v191 = vld [vmem:[%s5 + $0x18] sm:$0xf]
  %v192 = vld [vmem:[%s5 + $0x1c] sm:$0xf]
  %v193 = vld [vmem:[%s5 + $0x20] sm:$0xf]
  %v194 = vld [vmem:[%s5 + $0x24] sm:$0xf]
  %v195 = vld [vmem:[%s5 + $0x28] sm:$0xf]
  %v196 = vld [vmem:[%s5 + $0x2c] sm:$0xf]
  %v197 = vld [vmem:[%s5 + $0x30] sm:$0xf]
  %v198 = vld [vmem:[%s5 + $0x34] sm:$0xf]
  %v199 = vld [vmem:[%s5 + $0x38] sm:$0xf]
  %v200 = vld [vmem:[%s5 + $0x3c] sm:$0xf]
  %v201 = vld [vmem:[%s6] sm:$0x1]
  %v203 = vlaneseq
  %v204 = vshrl.u32 %v203, 7
  %v205 = vsub.s32 0, %v204
  %v206 = vrot.slane %v201, %v205
  %v224 = vunpack.c.l.b16 %v185
  %v225 = vunpack.c.l.b16 %v186
  %v226 = vunpack.c.l.b16 %v187
  %v227 = vunpack.c.l.b16 %v188
  %v228 = vunpack.c.l.b16 %v189
  %v229 = vunpack.c.l.b16 %v190
  %v230 = vunpack.c.l.b16 %v191
  %v231 = vunpack.c.l.b16 %v192
  %v232 = vunpack.c.l.b16 %v193
  %v233 = vunpack.c.l.b16 %v194
  %v234 = vunpack.c.l.b16 %v195
  %v235 = vunpack.c.l.b16 %v196
  %v236 = vunpack.c.l.b16 %v197
  %v237 = vunpack.c.l.b16 %v198
  %v238 = vunpack.c.l.b16 %v199
  %v239 = vunpack.c.l.b16 %v200
  %v240 = vpack.c.b16 %v225, %v224
  %v241 = vpack.c.b16 %v227, %v226
  %v242 = vpack.c.b16 %v229, %v228
  %v243 = vpack.c.b16 %v231, %v230
  %v244 = vpack.c.b16 %v233, %v232
  %v245 = vpack.c.b16 %v235, %v234
  %v246 = vpack.c.b16 %v237, %v236
  %v247 = vpack.c.b16 %v239, %v238
  %256 = vmatprep.subr.bf16.mxu0 0
  %257 = vmatpush1.bf16.msra.mxu0 %v247
  %258 = vmatprep.subr.bf16.mxu0 0
  %259 = vmatpush1.bf16.msra.mxu0 %v246
  %260 = vmatprep.subr.bf16.mxu0 0
  %261 = vmatpush1.bf16.msra.mxu0 %v245
  %262 = vmatprep.subr.bf16.mxu0 0
  %263 = vmatpush1.bf16.msra.mxu0 %v244
  %264 = vmatprep.subr.bf16.mxu0 0
  %265 = vmatpush1.bf16.msra.mxu0 %v243
  %266 = vmatprep.subr.bf16.mxu0 0
  %267 = vmatpush1.bf16.msra.mxu0 %v242
  %268 = vmatprep.subr.bf16.mxu0 0
  %269 = vmatpush1.bf16.msra.mxu0 %v241
  %270 = vmatprep.subr.bf16.mxu0 0
  %271 = vmatpush1.bf16.msra.mxu0 %v240
  %272 = vmatprep.subr.bf16.mxu0 0
  %273 = vmatpush2.bf16.msra.mxu0 0
  %274 = vmatprep.subr.bf16.mxu0 0
  %275 = vmatpush2.bf16.msra.mxu0 0
  %276 = vmatprep.subr.bf16.mxu0 0
  %277 = vmatpush2.bf16.msra.mxu0 0
  %278 = vmatprep.subr.bf16.mxu0 0
  %279 = vmatpush2.bf16.msra.mxu0 0
  %280 = vmatprep.subr.bf16.mxu0 0
  %281 = vmatpush2.bf16.msra.mxu0 0
  %282 = vmatprep.subr.bf16.mxu0 0
  %283 = vmatpush2.bf16.msra.mxu0 0
  %284 = vmatprep.subr.bf16.mxu0 0
  %285 = vmatpush2.bf16.msra.mxu0 0
  %286 = vmatprep.subr.bf16.mxu0 0
  %287 = vmatpush2.bf16.msra.mxu0 0
  %288 = vmatprep.mubr.bf16.mxu0 0
  %289 = vmatmul.mubr.bf16.gmra.mxu0 %v184
  %v290 = vpop.f32.mrf.mxu0
  %v291 = vadd.f32 %v206, %v290
  %v292 = vpop.f32.mrf.mxu0
  %v293 = vpop.f32.mrf.mxu0
  %v294 = vpop.f32.mrf.mxu0
  %295 = vdwg.mxu0
  %v296 = vmax.f32 %v291, 0.0
  %v297 = vld [vmem:[%s7] sm:$0x1]
  %v298 = vld [vmem:[%s8] sm:$0x1]
  %299 = vadd.xlane.f32.xlu0 %v296
  %v300 = vpop.xlane.xlu0 %299
  %v301 = vmul.f32 %v300, 0.03125
  %v302 = vsub.f32 %v296, %v301
  %v303 = vsel %vm160, %v302, 0.0
  %v304 = vmul.f32 %v303, %v303
  %305 = vadd.xlane.f32.xlu0 %v304
  %v306 = vpop.xlane.xlu0 %305
  %v307 = vmul.f32 %v306, 0.03125
  %v308 = vadd.f32 %v307, 1e-05
  %v309 = vrsqrt.pop %v308
  %v310 = vmul.f32 %v303, %v309
  %v312 = vlaneseq
  %v313 = vshrl.u32 %v312, 7
  %v314 = vsub.s32 0, %v313
  %v315 = vrot.slane %v297, %v314
  %v317 = vmul.f32 %v310, %v315
  %v319 = vlaneseq
  %v320 = vshrl.u32 %v319, 7
  %v321 = vsub.s32 0, %v320
  %v322 = vrot.slane %v298, %v321
  %v324 = vadd.f32 %v317, %v322
  %v325 = vpack.c.bf16 %v324, %v324
  %v326 = vld [vmem:[%s9] sm:$0xf]
  %v327 = vld [vmem:[%s9 + $0x4] sm:$0xf]
  %v328 = vld [vmem:[%s9 + $0x8] sm:$0xf]
  %v329 = vld [vmem:[%s9 + $0xc] sm:$0xf]
  %v330 = vld [vmem:[%s9 + $0x10] sm:$0xf]
  %v331 = vld [vmem:[%s9 + $0x14] sm:$0xf]
  %v332 = vld [vmem:[%s9 + $0x18] sm:$0xf]
  %v333 = vld [vmem:[%s9 + $0x1c] sm:$0xf]
  %v334 = vld [vmem:[%s9 + $0x20] sm:$0xf]
  %v335 = vld [vmem:[%s9 + $0x24] sm:$0xf]
  %v336 = vld [vmem:[%s9 + $0x28] sm:$0xf]
  %v337 = vld [vmem:[%s9 + $0x2c] sm:$0xf]
  %v338 = vld [vmem:[%s9 + $0x30] sm:$0xf]
  %v339 = vld [vmem:[%s9 + $0x34] sm:$0xf]
  %v340 = vld [vmem:[%s9 + $0x38] sm:$0xf]
  %v341 = vld [vmem:[%s9 + $0x3c] sm:$0xf]
  %v342 = vld [vmem:[%s10] sm:$0x1]
  %v344 = vlaneseq
  %v345 = vshrl.u32 %v344, 7
  %v346 = vsub.s32 0, %v345
  %v347 = vrot.slane %v342, %v346
  %v365 = vunpack.c.l.b16 %v326
  %v366 = vunpack.c.l.b16 %v327
  %v367 = vunpack.c.l.b16 %v328
  %v368 = vunpack.c.l.b16 %v329
  %v369 = vunpack.c.l.b16 %v330
  %v370 = vunpack.c.l.b16 %v331
  %v371 = vunpack.c.l.b16 %v332
  %v372 = vunpack.c.l.b16 %v333
  %v373 = vunpack.c.l.b16 %v334
  %v374 = vunpack.c.l.b16 %v335
  %v375 = vunpack.c.l.b16 %v336
  %v376 = vunpack.c.l.b16 %v337
  %v377 = vunpack.c.l.b16 %v338
  %v378 = vunpack.c.l.b16 %v339
  %v379 = vunpack.c.l.b16 %v340
  %v380 = vunpack.c.l.b16 %v341
  %v381 = vpack.c.b16 %v366, %v365
  %v382 = vpack.c.b16 %v368, %v367
  %v383 = vpack.c.b16 %v370, %v369
  %v384 = vpack.c.b16 %v372, %v371
  %v385 = vpack.c.b16 %v374, %v373
  %v386 = vpack.c.b16 %v376, %v375
  %v387 = vpack.c.b16 %v378, %v377
  %v388 = vpack.c.b16 %v380, %v379
  %397 = vmatprep.subr.bf16.mxu0 0
  %398 = vmatpush1.bf16.msra.mxu0 %v388
  %399 = vmatprep.subr.bf16.mxu0 0
  %400 = vmatpush1.bf16.msra.mxu0 %v387
  %401 = vmatprep.subr.bf16.mxu0 0
  %402 = vmatpush1.bf16.msra.mxu0 %v386
  %403 = vmatprep.subr.bf16.mxu0 0
  %404 = vmatpush1.bf16.msra.mxu0 %v385
  %405 = vmatprep.subr.bf16.mxu0 0
  %406 = vmatpush1.bf16.msra.mxu0 %v384
  %407 = vmatprep.subr.bf16.mxu0 0
  %408 = vmatpush1.bf16.msra.mxu0 %v383
  %409 = vmatprep.subr.bf16.mxu0 0
  %410 = vmatpush1.bf16.msra.mxu0 %v382
  %411 = vmatprep.subr.bf16.mxu0 0
  %412 = vmatpush1.bf16.msra.mxu0 %v381
  %413 = vmatprep.subr.bf16.mxu0 0
  %414 = vmatpush2.bf16.msra.mxu0 0
  %415 = vmatprep.subr.bf16.mxu0 0
  %416 = vmatpush2.bf16.msra.mxu0 0
  %417 = vmatprep.subr.bf16.mxu0 0
  %418 = vmatpush2.bf16.msra.mxu0 0
  %419 = vmatprep.subr.bf16.mxu0 0
  %420 = vmatpush2.bf16.msra.mxu0 0
  %421 = vmatprep.subr.bf16.mxu0 0
  %422 = vmatpush2.bf16.msra.mxu0 0
  %423 = vmatprep.subr.bf16.mxu0 0
  %424 = vmatpush2.bf16.msra.mxu0 0
  %425 = vmatprep.subr.bf16.mxu0 0
  %426 = vmatpush2.bf16.msra.mxu0 0
  %427 = vmatprep.subr.bf16.mxu0 0
  %428 = vmatpush2.bf16.msra.mxu0 0
  %429 = vmatprep.mubr.bf16.mxu0 0
  %430 = vmatmul.mubr.bf16.gmra.mxu0 %v325
  %v431 = vpop.f32.mrf.mxu0
  %v432 = vadd.f32 %v347, %v431
  %v433 = vpop.f32.mrf.mxu0
  %v434 = vpop.f32.mrf.mxu0
  %v435 = vpop.f32.mrf.mxu0
  %436 = vdwg.mxu0
  %437 = vst [vmem:[%s11] sm:$0xff] %v432
  // Predicated region
  $region46: #{_forward.1} parent=0 // pred_check
    _
  $region47: #{_forward.1} parent=0 // pred_check_branch
    %439 = sbr.rel (0) target = $region49
  $region48: #{_forward.1} parent=0 // pred_region
    _
  $region49: #{_forward.1} parent=0 // pred_fallthru
    _
  // Predicated region
  $region50: #{_forward.1} parent=0 // pred_check
    _
  $region51: #{_forward.1} parent=0 // pred_check_branch
    %441 = sbr.rel (0) target = $region53
  $region52: #{_forward.1} parent=0 // pred_region
    _
  $region53: #{_forward.1} parent=0 // pred_fallthru
    _

</llo_original>
